<compile_context>
chip_gen: v7x
topology: tpu7x:2x2x1
jax: 0.10.0
libtpu: 0.0.40
codegen_flags: <defaults>
</compile_context>

<pallas_src>
import functools

import jax
import jax.numpy as jnp
from jax.experimental import pallas as pl
from jax.experimental.pallas import tpu as pltpu


def _round_up(x, m):
    return ((x + m - 1) // m) * m


def _cdiv(a, b):
    return (a + b - 1) // b


def fcnet_kernel(x_ref, w1_ref, b1_ref, w2_ref, b2_ref, w3_ref, b3_ref,
                 w4_ref, b4_ref, out_ref):
    # fc1 + relu: x arrives f32; bf16 cast happens here on the VPU (hidden
    # under the MXU), f32 accumulation on the MXU.
    h = jnp.dot(x_ref[...].astype(jnp.bfloat16), w1_ref[...],
                preferred_element_type=jnp.float32)
    # Bias + ReLU in f32, then immediately narrow the live intermediate to
    # bf16 (halves spill bytes / VMEM scratch).
    h = jnp.maximum(h + b1_ref[...], 0.0).astype(jnp.bfloat16)
    # dropout1: identity (eval mode)
    # fc2 + relu
    h = jnp.dot(h, w2_ref[...], preferred_element_type=jnp.float32)
    h = jnp.maximum(h + b2_ref[...], 0.0).astype(jnp.bfloat16)
    # dropout2: identity (eval mode)
    # fc3 + relu
    h = jnp.dot(h, w3_ref[...], preferred_element_type=jnp.float32)
    h = jnp.maximum(h + b3_ref[...], 0.0).astype(jnp.bfloat16)
    # dropout3: identity (eval mode)
    # fc4: class axis is zero-padded to 128 lanes; padded biases are -1e30.
    logits = jnp.dot(h, w4_ref[...], preferred_element_type=jnp.float32)
    logits = logits + b4_ref[...]
    # softmax over dim=1; padded classes contribute exp(-1e30) == 0.
    m = jnp.max(logits, axis=-1, keepdims=True)
    e = jnp.exp(logits - m)
    denom = jnp.sum(e, axis=-1, keepdims=True)
    probs = e * pl.reciprocal(denom, approx=True)
    # bf16 writeback: halves the padded [B,128] output stream (the largest).
    out_ref[...] = probs.astype(out_ref.dtype)


def prepare_params(params):
    """One-time parameter prep. Call OUTSIDE the per-step jitted forward.

    * weights cast to bf16 once (no recurring cast pass per inference call);
    * fc4 columns zero-padded to a multiple of 128 lanes, padded biases set
      to -1e30 so the padded logits vanish after softmax;
    * biases kept f32 for the VPU add path.
    """
    w4, b4 = params["w4"], params["b4"]
    num_classes = w4.shape[1]
    c_pad = _round_up(num_classes, 128)
    if c_pad != num_classes:
        w4 = jnp.pad(w4, ((0, 0), (0, c_pad - num_classes)))
        b4 = jnp.pad(b4, ((0, 0), (0, c_pad - num_classes)),
                     constant_values=-1e30)
    pairs = ((params["w1"], params["b1"]), (params["w2"], params["b2"]),
             (params["w3"], params["b3"]), (w4, b4))
    prep = {}
    for idx, (w, b) in enumerate(pairs, start=1):
        prep[f"w{idx}"] = w.astype(jnp.bfloat16)
        prep[f"b{idx}"] = b.astype(jnp.float32)
    return prep


@functools.partial(jax.jit, static_argnames=("num_classes", "batch_tile"))
def fcnet_forward(x, prep, num_classes, batch_tile=1024):
    """FCNet forward pass with a single fused Pallas kernel.

    x: [B, input_size] float32.
    prep: output of prepare_params() (bf16 weights, f32 biases, padded fc4).
    Returns [B, num_classes] bfloat16 softmax probabilities.
    """
    w1, b1 = prep["w1"], prep["b1"]
    w2, b2 = prep["w2"], prep["b2"]
    w3, b3 = prep["w3"], prep["b3"]
    w4, b4 = prep["w4"], prep["b4"]

    B, in_dim = x.shape
    c_pad = w4.shape[1]

    # Batch tiling:
    #  * 1024-row tiles amortize the ~0.35 us per-grid-step overhead while
    #    keeping the estimated VMEM footprint well under v7x's 32 MiB scoped
    #    default;
    #  * tiny batches shrink to a multiple of 16 rows (bf16 sublane granule);
    #  * a large batch that would fit in one tile is split so grid >= 2 and
    #    both v7x TensorCores get work.
    tile_b = min(batch_tile, _round_up(B, 16))
    if B > 32 and tile_b >= B:
        tile_b = _round_up(_cdiv(B, 2), 16)
    B_pad = _round_up(B, tile_b)
    if B_pad != B:
        x = jnp.pad(x, ((0, B_pad - B), (0, 0)))
    grid = (B_pad // tile_b,)

    param_bytes = sum(a.size * a.dtype.itemsize
                      for a in (w1, b1, w2, b2, w3, b3, w4, b4))

    # Rough peak-VMEM estimate: double-buffered x (f32) and out (bf16) blocks,
    # default double-buffered (constant) param blocks, plus intermediate slack.
    h_dims = (w1.shape[1], w2.shape[1], w3.shape[1])
    vmem_est = (2 * tile_b * in_dim * 4
                + 2 * tile_b * c_pad * 2
                + 2 * param_bytes
                + 2 * tile_b * sum(h_dims) * 4)
    vmem_limit = None
    if vmem_est > 16 * 1024 * 1024:  # above v5e's default scoped limit
        vmem_limit = min(64 * 1024 * 1024,
                         _round_up(int(vmem_est * 1.25), 1 << 20))

    flops = 2 * B_pad * (in_dim * w1.shape[1]
                         + w2.shape[0] * w2.shape[1]
                         + w3.shape[0] * w3.shape[1]
                         + w4.shape[0] * c_pad)
    bytes_accessed = (B_pad * in_dim * 4      # x read (f32)
                      + param_bytes           # weights/biases
                      + B_pad * c_pad * 2)    # bf16 output write
    cost = pl.CostEstimate(flops=flops,
                           transcendentals=B_pad * (c_pad + 1),
                           bytes_accessed=bytes_accessed)

    def rep(shape):
        # Constant index_map -> block stays VMEM-resident across grid steps.
        return pl.BlockSpec(shape, lambda i: (0, 0))

    out = pl.pallas_call(
        fcnet_kernel,
        out_shape=jax.ShapeDtypeStruct((B_pad, c_pad), jnp.bfloat16),
        grid_spec=pltpu.PrefetchScalarGridSpec(
            num_scalar_prefetch=0,
            grid=grid,
            in_specs=[
                pl.BlockSpec((tile_b, in_dim), lambda i: (i, 0)),
                rep(w1.shape), rep(b1.shape),
                rep(w2.shape), rep(b2.shape),
                rep(w3.shape), rep(b3.shape),
                rep(w4.shape), rep(b4.shape),
            ],
            out_specs=pl.BlockSpec((tile_b, c_pad), lambda i: (i, 0)),
        ),
        compiler_params=pltpu.CompilerParams(
            dimension_semantics=("parallel",),
            vmem_limit_bytes=vmem_limit,
        ),
        cost_estimate=cost,
    )(x, w1, b1, w2, b2, w3, b3, w4, b4)

    return out[:B, :num_classes]


def init_fcnet_params(key, input_size, num_classes):
    """Deterministic init mimicking nn.Linear defaults (uniform +/- 1/sqrt(fan_in))."""
    dims = [(input_size, 512), (512, 256), (256, 128), (128, num_classes)]
    params = {}
    for idx, (fan_in, fan_out) in enumerate(dims, start=1):
        key, kw, kb = jax.random.split(key, 3)
        bound = 1.0 / jnp.sqrt(jnp.float32(fan_in))
        params[f"w{idx}"] = jax.random.uniform(
            kw, (fan_in, fan_out), jnp.float32, -bound, bound)
        params[f"b{idx}"] = jax.random.uniform(
            kb, (1, fan_out), jnp.float32, -bound, bound)
    return params


def fcnet_reference_f32(x, params):
    """Pure-JAX f32 reference for correctness checking."""
    h = jnp.maximum(x @ params["w1"] + params["b1"], 0.0)
    h = jnp.maximum(h @ params["w2"] + params["b2"], 0.0)
    h = jnp.maximum(h @ params["w3"] + params["b3"], 0.0)
    logits = h @ params["w4"] + params["b4"]
    return jax.nn.softmax(logits, axis=1)


def fcnet_reference_bf16(x, params):
    """Reference using the same bf16-in / f32-accumulate matmul recipe."""
    def mm(a, w):
        return jnp.dot(a.astype(jnp.bfloat16), w.astype(jnp.bfloat16),
                       preferred_element_type=jnp.float32)
    h = jnp.maximum(mm(x, params["w1"]) + params["b1"], 0.0)
    h = jnp.maximum(mm(h, params["w2"]) + params["b2"], 0.0)
    h = jnp.maximum(mm(h, params["w3"]) + params["b3"], 0.0)
    logits = mm(h, params["w4"]) + params["b4"]
    return jax.nn.softmax(logits, axis=1)


def _check(out, x, params, num_classes):
    out_f32 = out.astype(jnp.float32)
    ref32 = fcnet_reference_f32(x, params)
    ref16 = fcnet_reference_bf16(x, params)
    assert out.shape == (x.shape[0], num_classes), out.shape
    # bf16 matmul inputs + bf16 output store + approx reciprocal -> loose tols.
    assert jnp.allclose(out_f32, ref32, atol=5e-2, rtol=5e-2), "mismatch vs f32 reference"
    assert jnp.allclose(out_f32, ref16, atol=2e-2, rtol=2e-2), "mismatch vs bf16 reference"
    assert jnp.allclose(jnp.sum(out_f32, axis=1), 1.0, atol=2e-2)


if __name__ == "__main__":
    key = jax.random.PRNGKey(0)
    k_params, k_x1, k_x2 = jax.random.split(key, 3)

    batch = 2
    input_size = 64
    num_classes = 10

    params = init_fcnet_params(k_params, input_size, num_classes)
    prep = prepare_params(params)

    # Tiny batch (grid = 1, 16-row tile).
    x1 = jax.random.normal(k_x1, (batch, input_size), jnp.float32)
    out1 = jax.block_until_ready(fcnet_forward(x1, prep, num_classes))
    _check(out1, x1, params, num_classes)

    # Slightly larger batch: exercises batch padding and the grid >= 2 path.
    x2 = jax.random.normal(k_x2, (48, input_size), jnp.float32)
    out2 = jax.block_until_ready(fcnet_forward(x2, prep, num_classes))
    _check(out2, x2, params, num_classes)

    print("KERNEL_OK")
</pallas_src>

<mosaic_0001>
module attributes {stable_mosaic.version = 11 : i64} {
  func.func @fcnet_kernel(%arg0: i32, %arg1: memref<16x64xf32, #tpu.memory_space<vmem>>, %arg2: memref<64x512xbf16, #tpu.memory_space<vmem>>, %arg3: memref<1x512xf32, #tpu.memory_space<vmem>>, %arg4: memref<512x256xbf16, #tpu.memory_space<vmem>>, %arg5: memref<1x256xf32, #tpu.memory_space<vmem>>, %arg6: memref<256x128xbf16, #tpu.memory_space<vmem>>, %arg7: memref<1x128xf32, #tpu.memory_space<vmem>>, %arg8: memref<128x128xbf16, #tpu.memory_space<vmem>>, %arg9: memref<1x128xf32, #tpu.memory_space<vmem>>, %arg10: memref<16x128xbf16, #tpu.memory_space<vmem>>) attributes {dimension_semantics = [#tpu.dimension_semantics<parallel>], iteration_bounds = array<i64: 1>, scalar_prefetch = 0 : i64, scratch_operands = 0 : i64, tpu.core_type = #tpu.core_type<tc>, window_params = [{transform_indices = @transform_0, window_bounds = array<i64: 16, 64>}, {pipeline_mode = #tpu.pipeline_mode<synchronous>, transform_indices = @transform_1, window_bounds = array<i64: 64, 512>}, {pipeline_mode = #tpu.pipeline_mode<synchronous>, transform_indices = @transform_2, window_bounds = array<i64: 1, 512>}, {pipeline_mode = #tpu.pipeline_mode<synchronous>, transform_indices = @transform_3, window_bounds = array<i64: 512, 256>}, {pipeline_mode = #tpu.pipeline_mode<synchronous>, transform_indices = @transform_4, window_bounds = array<i64: 1, 256>}, {pipeline_mode = #tpu.pipeline_mode<synchronous>, transform_indices = @transform_5, window_bounds = array<i64: 256, 128>}, {pipeline_mode = #tpu.pipeline_mode<synchronous>, transform_indices = @transform_6, window_bounds = array<i64: 1, 128>}, {pipeline_mode = #tpu.pipeline_mode<synchronous>, transform_indices = @transform_7, window_bounds = array<i64: 128, 128>}, {pipeline_mode = #tpu.pipeline_mode<synchronous>, transform_indices = @transform_8, window_bounds = array<i64: 1, 128>}, {transform_indices = @transform_9, window_bounds = array<i64: 16, 128>}]} {
    %c0 = arith.constant 0 : index
    %c0_0 = arith.constant 0 : index
    %0 = vector.load %arg1[%c0, %c0_0] : memref<16x64xf32, #tpu.memory_space<vmem>>, vector<16x64xf32>
    %1 = arith.truncf %0 : vector<16x64xf32> to vector<16x64xbf16>
    %c0_1 = arith.constant 0 : index
    %c0_2 = arith.constant 0 : index
    %2 = vector.load %arg2[%c0_1, %c0_2] : memref<64x512xbf16, #tpu.memory_space<vmem>>, vector<64x512xbf16>
    %cst = arith.constant dense<0.000000e+00> : vector<16x512xf32>
    %3 = tpu.matmul %1, %2, %cst {dimension_numbers = #tpu.dot_dimension_numbers<[1], [0], [0], [1], [0, 0, 1, 1], [], []>} : vector<16x64xbf16>, vector<64x512xbf16>, vector<16x512xf32> -> vector<16x512xf32>
    %c0_3 = arith.constant 0 : index
    %c0_4 = arith.constant 0 : index
    %4 = vector.load %arg3[%c0_3, %c0_4] : memref<1x512xf32, #tpu.memory_space<vmem>>, vector<1x512xf32>
    %5 = vector.broadcast %4 : vector<1x512xf32> to vector<16x512xf32>
    %6 = arith.addf %3, %5 : vector<16x512xf32>
    %cst_5 = arith.constant 0.000000e+00 : f32
    %7 = vector.broadcast %cst_5 : f32 to vector<16x512xf32>
    %8 = arith.maximumf %6, %7 : vector<16x512xf32>
    %9 = arith.truncf %8 : vector<16x512xf32> to vector<16x512xbf16>
    %c0_6 = arith.constant 0 : index
    %c0_7 = arith.constant 0 : index
    %10 = vector.load %arg4[%c0_6, %c0_7] : memref<512x256xbf16, #tpu.memory_space<vmem>>, vector<512x256xbf16>
    %cst_8 = arith.constant dense<0.000000e+00> : vector<16x256xf32>
    %11 = tpu.matmul %9, %10, %cst_8 {dimension_numbers = #tpu.dot_dimension_numbers<[1], [0], [0], [1], [0, 0, 1, 1], [], []>} : vector<16x512xbf16>, vector<512x256xbf16>, vector<16x256xf32> -> vector<16x256xf32>
    %c0_9 = arith.constant 0 : index
    %c0_10 = arith.constant 0 : index
    %12 = vector.load %arg5[%c0_9, %c0_10] : memref<1x256xf32, #tpu.memory_space<vmem>>, vector<1x256xf32>
    %13 = vector.broadcast %12 : vector<1x256xf32> to vector<16x256xf32>
    %14 = arith.addf %11, %13 : vector<16x256xf32>
    %cst_11 = arith.constant 0.000000e+00 : f32
    %15 = vector.broadcast %cst_11 : f32 to vector<16x256xf32>
    %16 = arith.maximumf %14, %15 : vector<16x256xf32>
    %17 = arith.truncf %16 : vector<16x256xf32> to vector<16x256xbf16>
    %c0_12 = arith.constant 0 : index
    %c0_13 = arith.constant 0 : index
    %18 = vector.load %arg6[%c0_12, %c0_13] : memref<256x128xbf16, #tpu.memory_space<vmem>>, vector<256x128xbf16>
    %cst_14 = arith.constant dense<0.000000e+00> : vector<16x128xf32>
    %19 = tpu.matmul %17, %18, %cst_14 {dimension_numbers = #tpu.dot_dimension_numbers<[1], [0], [0], [1], [0, 0, 1, 1], [], []>} : vector<16x256xbf16>, vector<256x128xbf16>, vector<16x128xf32> -> vector<16x128xf32>
    %c0_15 = arith.constant 0 : index
    %c0_16 = arith.constant 0 : index
    %20 = vector.load %arg7[%c0_15, %c0_16] : memref<1x128xf32, #tpu.memory_space<vmem>>, vector<1x128xf32>
    %21 = vector.broadcast %20 : vector<1x128xf32> to vector<16x128xf32>
    %22 = arith.addf %19, %21 : vector<16x128xf32>
    %cst_17 = arith.constant 0.000000e+00 : f32
    %23 = vector.broadcast %cst_17 : f32 to vector<16x128xf32>
    %24 = arith.maximumf %22, %23 : vector<16x128xf32>
    %25 = arith.truncf %24 : vector<16x128xf32> to vector<16x128xbf16>
    %c0_18 = arith.constant 0 : index
    %c0_19 = arith.constant 0 : index
    %26 = vector.load %arg8[%c0_18, %c0_19] : memref<128x128xbf16, #tpu.memory_space<vmem>>, vector<128x128xbf16>
    %cst_20 = arith.constant dense<0.000000e+00> : vector<16x128xf32>
    %27 = tpu.matmul %25, %26, %cst_20 {dimension_numbers = #tpu.dot_dimension_numbers<[1], [0], [0], [1], [0, 0, 1, 1], [], []>} : vector<16x128xbf16>, vector<128x128xbf16>, vector<16x128xf32> -> vector<16x128xf32>
    %c0_21 = arith.constant 0 : index
    %c0_22 = arith.constant 0 : index
    %28 = vector.load %arg9[%c0_21, %c0_22] : memref<1x128xf32, #tpu.memory_space<vmem>>, vector<1x128xf32>
    %29 = vector.broadcast %28 : vector<1x128xf32> to vector<16x128xf32>
    %30 = arith.addf %27, %29 : vector<16x128xf32>
    %cst_23 = arith.constant dense<0xFF800000> : vector<16xf32>
    %31 = vector.multi_reduction <maximumf>, %30, %cst_23 [1] : vector<16x128xf32> to vector<16xf32>
    %32 = vector.shape_cast %31 : vector<16xf32> to vector<16x1xf32>
    %33 = vector.broadcast %32 : vector<16x1xf32> to vector<16x128xf32>
    %34 = arith.subf %30, %33 : vector<16x128xf32>
    %35 = math.exp %34 : vector<16x128xf32>
    %cst_24 = arith.constant dense<0.000000e+00> : vector<16xf32>
    %36 = vector.multi_reduction <add>, %35, %cst_24 [1] : vector<16x128xf32> to vector<16xf32>
    %37 = vector.shape_cast %36 : vector<16xf32> to vector<16x1xf32>
    %38 = tpu.reciprocal %37 {approx = true} : vector<16x1xf32> -> vector<16x1xf32>
    %39 = vector.broadcast %38 : vector<16x1xf32> to vector<16x128xf32>
    %40 = arith.mulf %35, %39 : vector<16x128xf32>
    %41 = arith.truncf %40 : vector<16x128xf32> to vector<16x128xbf16>
    %c0_25 = arith.constant 0 : index
    %c0_26 = arith.constant 0 : index
    %42 = vector.load %arg10[%c0_25, %c0_26] : memref<16x128xbf16, #tpu.memory_space<vmem>>, vector<16x128xbf16>
    tpu.vector_store %arg10[%c0_25, %c0_26], %41 {strides = array<i32>} : memref<16x128xbf16, #tpu.memory_space<vmem>>, vector<16x128xbf16>,
    return
  }
  func.func @transform_0(%arg0: i32) -> (i32, i32) {
    %c0_i32 = arith.constant 0 : i32
    %c0_i32_0 = arith.constant 0 : i32
    return %arg0, %c0_i32 : i32, i32
  }
  func.func @transform_1(%arg0: i32) -> (i32, i32) {
    %c0_i32 = arith.constant 0 : i32
    %c0_i32_0 = arith.constant 0 : i32
    %c0_i32_1 = arith.constant 0 : i32
    return %c0_i32, %c0_i32_0 : i32, i32
  }
  func.func @transform_2(%arg0: i32) -> (i32, i32) {
    %c0_i32 = arith.constant 0 : i32
    %c0_i32_0 = arith.constant 0 : i32
    %c0_i32_1 = arith.constant 0 : i32
    return %c0_i32, %c0_i32_0 : i32, i32
  }
  func.func @transform_3(%arg0: i32) -> (i32, i32) {
    %c0_i32 = arith.constant 0 : i32
    %c0_i32_0 = arith.constant 0 : i32
    %c0_i32_1 = arith.constant 0 : i32
    return %c0_i32, %c0_i32_0 : i32, i32
  }
  func.func @transform_4(%arg0: i32) -> (i32, i32) {
    %c0_i32 = arith.constant 0 : i32
    %c0_i32_0 = arith.constant 0 : i32
    %c0_i32_1 = arith.constant 0 : i32
    return %c0_i32, %c0_i32_0 : i32, i32
  }
  func.func @transform_5(%arg0: i32) -> (i32, i32) {
    %c0_i32 = arith.constant 0 : i32
    %c0_i32_0 = arith.constant 0 : i32
    %c0_i32_1 = arith.constant 0 : i32
    return %c0_i32, %c0_i32_0 : i32, i32
  }
  func.func @transform_6(%arg0: i32) -> (i32, i32) {
    %c0_i32 = arith.constant 0 : i32
    %c0_i32_0 = arith.constant 0 : i32
    %c0_i32_1 = arith.constant 0 : i32
    return %c0_i32, %c0_i32_0 : i32, i32
  }
  func.func @transform_7(%arg0: i32) -> (i32, i32) {
    %c0_i32 = arith.constant 0 : i32
    %c0_i32_0 = arith.constant 0 : i32
    %c0_i32_1 = arith.constant 0 : i32
    return %c0_i32, %c0_i32_0 : i32, i32
  }
  func.func @transform_8(%arg0: i32) -> (i32, i32) {
    %c0_i32 = arith.constant 0 : i32
    %c0_i32_0 = arith.constant 0 : i32
    %c0_i32_1 = arith.constant 0 : i32
    return %c0_i32, %c0_i32_0 : i32, i32
  }
  func.func @transform_9(%arg0: i32) -> (i32, i32) {
    %c0_i32 = arith.constant 0 : i32
    %c0_i32_0 = arith.constant 0 : i32
    return %arg0, %c0_i32 : i32, i32
  }
}

</mosaic_0001>

<llo_original>
// kernel: fcnet_forward.1
$region0: #{fcnet_forward.1}
  #allocation0 [shape = 'u32[]', space=smem, size = 0x4, offset = 0x4, fixed_abs, tag = 'smem constant byte address 0x4 - core index']
  #allocation1 [shape = 'u32[144,128]{1,0:T(1,128)}', space=vmem, size = 0x12000, scoped, tag = 'internal scratch']
  %s0 = inlined_call_operand.vmem [shape: f32[16,64], index: 0, kind: input, shape index: {}]
  %s1 = inlined_call_operand.hbm [shape: bf16[64,512], index: 1, kind: input, shape index: {}]
  %s2 = inlined_call_operand.vmem [shape: f32[1,512], index: 2, kind: input, shape index: {}]
  %s3 = inlined_call_operand.hbm [shape: bf16[512,256], index: 3, kind: input, shape index: {}]
  %s4 = inlined_call_operand.vmem [shape: f32[1,256], index: 4, kind: input, shape index: {}]
  %s5 = inlined_call_operand.hbm [shape: bf16[256,128], index: 5, kind: input, shape index: {}]
  %s6 = inlined_call_operand.vmem [shape: f32[1,128], index: 6, kind: input, shape index: {}]
  %s7 = inlined_call_operand.hbm [shape: bf16[128,128], index: 7, kind: input, shape index: {}]
  %s8 = inlined_call_operand.vmem [shape: f32[1,128], index: 8, kind: input, shape index: {}]
  %s9 = inlined_call_operand.vmem [shape: bf16[16,128], index: 9, kind: output, shape index: {}]
  %s10 = sld [smem:[#allocation0]]
  $region62: #{fcnet_forward.1} parent=0
    _
  %s12 = ssub.s32 1, %s10
  %s13 = scalar_select 0, %s12, %s10
  $region1: #{fcnet_forward.1} parent=0
    #allocation2 [shape = 'u8[65536]{0}', space=vmem, size = 0x10000, scoped, tag = 'input window, operand 1, single buffered']
    #allocation3 [shape = 's32[1]{0}', space=sflag, size = 0x4, scoped, tag = 'scoped memory for fcnet_forward.1']
    #allocation4 [shape = 'u8[262144]{0}', space=vmem, size = 0x40000, scoped, tag = 'input window, operand 3, single buffered']
    #allocation5 [shape = 's32[1]{0}', space=sflag, size = 0x4, scoped, tag = 'scoped memory for fcnet_forward.1']
    #allocation6 [shape = 'u8[65536]{0}', space=vmem, size = 0x10000, scoped, tag = 'input window, operand 5, single buffered']
    #allocation7 [shape = 'u8[32768]{0}', space=vmem, size = 0x8000, scoped, tag = 'input window, operand 7, single buffered']
    #allocation8 [shape = 's32[1]{0}', space=sflag, size = 0x4, scoped, tag = 'scoped memory for fcnet_forward.1']
    %14 = vsyncpa [#allocation3], 0
    %15 = vsyncpa [#allocation5], 0
    %16 = vsyncpa [#allocation8], 0
    // Predicated region
    $region2: #{fcnet_forward.1} parent=1 // pred_check
      _
    $region3: #{fcnet_forward.1} parent=1 // pred_check_branch
      %18 = sbr.rel (0) target = $region5
    $region4: #{fcnet_forward.1} parent=1 // pred_region
      _
    $region5: #{fcnet_forward.1} parent=1 // pred_fallthru
      _
    // Predicated region
    $region6: #{fcnet_forward.1} parent=1 // pred_check
      _
    $region7: #{fcnet_forward.1} parent=1 // pred_check_branch
      %20 = sbr.rel (0) target = $region9
    $region8: #{fcnet_forward.1} parent=1 // pred_region
      %s22 = ssub.s32 2048, 2048
      %23 = vsyncadd [#allocation3], %s22
      %s24 = sshll.u32 [#allocation2], 4
      %s25 = int_to_ptr.vmem [resolvable:$true] %s24
      %30 = dma.hbm_to_vmem [thread:$0]  %s1, 2048, %s25, [#allocation3], 256, 256, 16
    $region9: #{fcnet_forward.1} parent=1 // pred_fallthru
      _
    // Predicated region
    $region10: #{fcnet_forward.1} parent=1 // pred_check
      _
    $region11: #{fcnet_forward.1} parent=1 // pred_check_branch
      %32 = sbr.rel (0) target = $region13
    $region12: #{fcnet_forward.1} parent=1 // pred_region
      _
    $region13: #{fcnet_forward.1} parent=1 // pred_fallthru
      _
    // Predicated region
    $region14: #{fcnet_forward.1} parent=1 // pred_check
      _
    $region15: #{fcnet_forward.1} parent=1 // pred_check_branch
      %34 = sbr.rel (0) target = $region17
    $region16: #{fcnet_forward.1} parent=1 // pred_region
      %s36 = ssub.s32 8192, 8192
      %37 = vsyncadd [#allocation5], %s36
      %s38 = sshll.u32 [#allocation4], 4
      %s39 = int_to_ptr.vmem [resolvable:$true] %s38
      %44 = dma.hbm_to_vmem [thread:$0]  %s3, 8192, %s39, [#allocation5], 128, 128, 8
    $region17: #{fcnet_forward.1} parent=1 // pred_fallthru
      _
    // Predicated region
    $region18: #{fcnet_forward.1} parent=1 // pred_check
      _
    $region19: #{fcnet_forward.1} parent=1 // pred_check_branch
      %46 = sbr.rel (0) target = $region21
    $region20: #{fcnet_forward.1} parent=1 // pred_region
      _
    $region21: #{fcnet_forward.1} parent=1 // pred_fallthru
      _
    // Predicated region
    $region22: #{fcnet_forward.1} parent=1 // pred_check
      _
    $region23: #{fcnet_forward.1} parent=1 // pred_check_branch
      %48 = sbr.rel (0) target = $region25
    $region24: #{fcnet_forward.1} parent=1 // pred_region
      %s50 = ssub.s32 2048, 2048
      %51 = vsyncadd [#allocation5], %s50
      %s52 = sshll.u32 [#allocation6], 4
      %s53 = int_to_ptr.vmem [resolvable:$true] %s52
      %58 = dma.hbm_to_vmem [thread:$0]  %s5, 2048, %s53, [#allocation5], 64, 64, 4
    $region25: #{fcnet_forward.1} parent=1 // pred_fallthru
      _
    // Predicated region
    $region26: #{fcnet_forward.1} parent=1 // pred_check
      _
    $region27: #{fcnet_forward.1} parent=1 // pred_check_branch
      %60 = sbr.rel (0) target = $region29
    $region28: #{fcnet_forward.1} parent=1 // pred_region
      _
    $region29: #{fcnet_forward.1} parent=1 // pred_fallthru
      _
    // Predicated region
    $region30: #{fcnet_forward.1} parent=1 // pred_check
      _
    $region31: #{fcnet_forward.1} parent=1 // pred_check_branch
      %62 = sbr.rel (0) target = $region33
    $region32: #{fcnet_forward.1} parent=1 // pred_region
      %s64 = ssub.s32 1024, 1024
      %65 = vsyncadd [#allocation8], %s64
      %s66 = sshll.u32 [#allocation7], 4
      %s67 = int_to_ptr.vmem [resolvable:$true] %s66
      %72 = dma.hbm_to_vmem [thread:$0]  %s7, 1024, %s67, [#allocation8], 64, 64, 4
    $region33: #{fcnet_forward.1} parent=1 // pred_fallthru
      _
    // Predicated region
    $region34: #{fcnet_forward.1} parent=1 // pred_check
      _
    $region35: #{fcnet_forward.1} parent=1 // pred_check_branch
      %74 = sbr.rel (0) target = $region37
    $region36: #{fcnet_forward.1} parent=1 // pred_region
      _
    $region37: #{fcnet_forward.1} parent=1 // pred_fallthru
      _
    // Predicated region
    $region38: #{fcnet_forward.1} parent=1 // pred_check
      _
    $region39: #{fcnet_forward.1} parent=1 // pred_check_branch
      %76 = sbr.rel (0) target = $region41
    $region40: #{fcnet_forward.1} parent=1 // pred_region
      %77 = dma.done [#allocation3], 2048
    $region41: #{fcnet_forward.1} parent=1 // pred_fallthru
      _
    // Predicated region
    $region42: #{fcnet_forward.1} parent=1 // pred_check
      _
    $region43: #{fcnet_forward.1} parent=1 // pred_check_branch
      %79 = sbr.rel (0) target = $region45
    $region44: #{fcnet_forward.1} parent=1 // pred_region
      %80 = dma.done [#allocation5], 8192
    $region45: #{fcnet_forward.1} parent=1 // pred_fallthru
      _
    // Predicated region
    $region46: #{fcnet_forward.1} parent=1 // pred_check
      _
    $region47: #{fcnet_forward.1} parent=1 // pred_check_branch
      %82 = sbr.rel (0) target = $region49
    $region48: #{fcnet_forward.1} parent=1 // pred_region
      %83 = dma.done [#allocation5], 2048
    $region49: #{fcnet_forward.1} parent=1 // pred_fallthru
      _
    // Predicated region
    $region50: #{fcnet_forward.1} parent=1 // pred_check
      _
    $region51: #{fcnet_forward.1} parent=1 // pred_check_branch
      %85 = sbr.rel (0) target = $region53
    $region52: #{fcnet_forward.1} parent=1 // pred_region
      %86 = dma.done [#allocation8], 1024
    $region53: #{fcnet_forward.1} parent=1 // pred_fallthru
      _
    %v88 = vld [vmem:[%s0] sm:$0xff]
    %v89 = vld [vmem:[%s0 + $0x8] sm:$0xff]
    %v90 = vpack.c.bf16 %v89, %v88
    %v91 = vld [vmem:[#allocation2] sm:$0xff]
    %v92 = vld [vmem:[#allocation2 + $0x8] sm:$0xff]
    %v93 = vld [vmem:[#allocation2 + $0x10] sm:$0xff]
    %v94 = vld [vmem:[#allocation2 + $0x18] sm:$0xff]
    %v95 = vld [vmem:[#allocation2 + $0x20] sm:$0xff]
    %v96 = vld [vmem:[#allocation2 + $0x28] sm:$0xff]
    %v97 = vld [vmem:[#allocation2 + $0x30] sm:$0xff]
    %v98 = vld [vmem:[#allocation2 + $0x38] sm:$0xff]
    %v99 = vld [vmem:[#allocation2 + $0x40] sm:$0xff]
    %v100 = vld [vmem:[#allocation2 + $0x48] sm:$0xff]
    %v101 = vld [vmem:[#allocation2 + $0x50] sm:$0xff]
    %v102 = vld [vmem:[#allocation2 + $0x58] sm:$0xff]
    %v103 = vld [vmem:[#allocation2 + $0x60] sm:$0xff]
    %v104 = vld [vmem:[#allocation2 + $0x68] sm:$0xff]
    %v105 = vld [vmem:[#allocation2 + $0x70] sm:$0xff]
    %v106 = vld [vmem:[#allocation2 + $0x78] sm:$0xff]
    %v107 = vld [vmem:[%s2] sm:$0xf]
    %v109 = vlaneseq
    %v110 = vshrl.u32 %v109, 7
    %v111 = vsub.s32 0, %v110
    %v112 = vrot.slane %v107, %v111
    %v113 = vlaneseq
    %v114 = vshrl.u32 %v113, 7
    %v115 = vsub.s32 1, %v114
    %v116 = vrot.slane %v107, %v115
    %v117 = vlaneseq
    %v118 = vshrl.u32 %v117, 7
    %v119 = vsub.s32 2, %v118
    %v120 = vrot.slane %v107, %v119
    %v121 = vlaneseq
    %v122 = vshrl.u32 %v121, 7
    %v123 = vsub.s32 3, %v122
    %v124 = vrot.slane %v107, %v123
    %v145 = vunpack.c.l.b16 %v91
    %v146 = vunpack.c.h.b16 %v91
    %v147 = vunpack.c.l.b16 %v92
    %v148 = vunpack.c.h.b16 %v92
    %v149 = vunpack.c.l.b16 %v93
    %v150 = vunpack.c.h.b16 %v93
    %v151 = vunpack.c.l.b16 %v94
    %v152 = vunpack.c.h.b16 %v94
    %v153 = vunpack.c.l.b16 %v95
    %v154 = vunpack.c.h.b16 %v95
    %v155 = vunpack.c.l.b16 %v96
    %v156 = vunpack.c.h.b16 %v96
    %v157 = vunpack.c.l.b16 %v97
    %v158 = vunpack.c.h.b16 %v97
    %v159 = vunpack.c.l.b16 %v98
    %v160 = vunpack.c.h.b16 %v98
    %v161 = vunpack.c.l.b16 %v99
    %v162 = vunpack.c.h.b16 %v99
    %v163 = vunpack.c.l.b16 %v100
    %v164 = vunpack.c.h.b16 %v100
    %v165 = vunpack.c.l.b16 %v101
    %v166 = vunpack.c.h.b16 %v101
    %v167 = vunpack.c.l.b16 %v102
    %v168 = vunpack.c.h.b16 %v102
    %v169 = vunpack.c.l.b16 %v103
    %v170 = vunpack.c.h.b16 %v103
    %v171 = vunpack.c.l.b16 %v104
    %v172 = vunpack.c.h.b16 %v104
    %v173 = vunpack.c.l.b16 %v105
    %v174 = vunpack.c.h.b16 %v105
    %v175 = vunpack.c.l.b16 %v106
    %v176 = vunpack.c.h.b16 %v106
    %v177 = vpack.c.b16 %v149, %v145
    %v178 = vpack.c.b16 %v150, %v146
    %v179 = vpack.c.b16 %v151, %v147
    %v180 = vpack.c.b16 %v152, %v148
    %v181 = vpack.c.b16 %v157, %v153
    %v182 = vpack.c.b16 %v158, %v154
    %v183 = vpack.c.b16 %v159, %v155
    %v184 = vpack.c.b16 %v160, %v156
    %v185 = vpack.c.b16 %v165, %v161
    %v186 = vpack.c.b16 %v166, %v162
    %v187 = vpack.c.b16 %v167, %v163
    %v188 = vpack.c.b16 %v168, %v164
    %v189 = vpack.c.b16 %v173, %v169
    %v190 = vpack.c.b16 %v174, %v170
    %v191 = vpack.c.b16 %v175, %v171
    %v192 = vpack.c.b16 %v176, %v172
    %vm209 = vcmask 523264
    %v211 = vsel %vm209, %v90, 0
    %213 = vmatprep.subr.bf16.mxu0 %v178
    %214 = vmatpush1.bf16.msra.mxu0 %v177
    %215 = vmatprep.subr.bf16.mxu0 %v182
    %216 = vmatpush1.bf16.msra.mxu0 %v181
    %217 = vmatprep.subr.bf16.mxu0 %v186
    %218 = vmatpush1.bf16.msra.mxu0 %v185
    %219 = vmatprep.subr.bf16.mxu0 %v190
    %220 = vmatpush1.bf16.msra.mxu0 %v189
    %221 = vmatprep.subr.bf16.mxu0 0
    %222 = vmatpush1.bf16.msra.mxu0 0
    %223 = vmatprep.subr.bf16.mxu0 0
    %224 = vmatpush1.bf16.msra.mxu0 0
    %225 = vmatprep.subr.bf16.mxu0 0
    %226 = vmatpush1.bf16.msra.mxu0 0
    %227 = vmatprep.subr.bf16.mxu0 0
    %228 = vmatpush1.bf16.msra.mxu0 0
    %229 = vmatprep.subr.bf16.mxu0 0
    %230 = vmatpush1.bf16.msra.mxu0 0
    %231 = vmatprep.subr.bf16.mxu0 0
    %232 = vmatpush1.bf16.msra.mxu0 0
    %233 = vmatprep.subr.bf16.mxu0 0
    %234 = vmatpush1.bf16.msra.mxu0 0
    %235 = vmatprep.subr.bf16.mxu0 0
    %236 = vmatpush1.bf16.msra.mxu0 0
    %237 = vmatprep.subr.bf16.mxu0 0
    %238 = vmatpush1.bf16.msra.mxu0 0
    %239 = vmatprep.subr.bf16.mxu0 0
    %240 = vmatpush1.bf16.msra.mxu0 0
    %241 = vmatprep.subr.bf16.mxu0 0
    %242 = vmatpush1.bf16.msra.mxu0 0
    %243 = vmatprep.subr.bf16.mxu0 0
    %244 = vmatpush1.bf16.msra.mxu0 0
    %245 = vmatprep.mubr.bf16.mxu0 0
    %246 = vmatmul.mubr.bf16.gmra.mrb[0].mxu0 %v211
    %v247 = vpop.f32.mrb[0].mxu0
    %v248 = vadd.f32 %v112, %v247
    %v249 = vpop.f32.mrb[0].mxu0
    %v250 = vadd.f32 %v116, %v249
    %v251 = vpop.f32.mrb[0].mxu0
    %v252 = vadd.f32 %v112, %v251
    %v253 = vpop.f32.mrb[0].mxu0
    %v254 = vadd.f32 %v116, %v253
    %255 = vdwg.mxu0
    %256 = vmatprep.subr.bf16.mxu0 %v180
    %257 = vmatpush1.bf16.msra.mxu0 %v179
    %258 = vmatprep.subr.bf16.mxu0 %v184
    %259 = vmatpush1.bf16.msra.mxu0 %v183
    %260 = vmatprep.subr.bf16.mxu0 %v188
    %261 = vmatpush1.bf16.msra.mxu0 %v187
    %262 = vmatprep.subr.bf16.mxu0 %v192
    %263 = vmatpush1.bf16.msra.mxu0 %v191
    %264 = vmatprep.subr.bf16.mxu0 0
    %265 = vmatpush1.bf16.msra.mxu0 0
    %266 = vmatprep.subr.bf16.mxu0 0
    %267 = vmatpush1.bf16.msra.mxu0 0
    %268 = vmatprep.subr.bf16.mxu0 0
    %269 = vmatpush1.bf16.msra.mxu0 0
    %270 = vmatprep.subr.bf16.mxu0 0
    %271 = vmatpush1.bf16.msra.mxu0 0
    %272 = vmatprep.subr.bf16.mxu0 0
    %273 = vmatpush1.bf16.msra.mxu0 0
    %274 = vmatprep.subr.bf16.mxu0 0
    %275 = vmatpush1.bf16.msra.mxu0 0
    %276 = vmatprep.subr.bf16.mxu0 0
    %277 = vmatpush1.bf16.msra.mxu0 0
    %278 = vmatprep.subr.bf16.mxu0 0
    %279 = vmatpush1.bf16.msra.mxu0 0
    %280 = vmatprep.subr.bf16.mxu0 0
    %281 = vmatpush1.bf16.msra.mxu0 0
    %282 = vmatprep.subr.bf16.mxu0 0
    %283 = vmatpush1.bf16.msra.mxu0 0
    %284 = vmatprep.subr.bf16.mxu0 0
    %285 = vmatpush1.bf16.msra.mxu0 0
    %286 = vmatprep.subr.bf16.mxu0 0
    %287 = vmatpush1.bf16.msra.mxu0 0
    %288 = vmatprep.mubr.bf16.mxu0 0
    %289 = vmatmul.mubr.bf16.gmra.mrb[0].mxu0 %v211
    %v290 = vpop.f32.mrb[0].mxu0
    %v291 = vadd.f32 %v120, %v290
    %v292 = vpop.f32.mrb[0].mxu0
    %v293 = vadd.f32 %v124, %v292
    %v294 = vpop.f32.mrb[0].mxu0
    %v295 = vadd.f32 %v120, %v294
    %v296 = vpop.f32.mrb[0].mxu0
    %v297 = vadd.f32 %v124, %v296
    %298 = vdwg.mxu0
    %v299 = vmax.f32 %v248, 0.0
    %v300 = vmax.f32 %v250, 0.0
    %v301 = vmax.f32 %v291, 0.0
    %v302 = vmax.f32 %v293, 0.0
    %v303 = vmax.f32 %v252, 0.0
    %v304 = vmax.f32 %v254, 0.0
    %v305 = vmax.f32 %v295, 0.0
    %v306 = vmax.f32 %v297, 0.0
    %v307 = vpack.c.bf16 %v303, %v299
    %v308 = vpack.c.bf16 %v304, %v300
    %v309 = vpack.c.bf16 %v305, %v301
    %v310 = vpack.c.bf16 %v306, %v302
    %v311 = vld [vmem:[#allocation4] sm:$0xff]
    %v312 = vld [vmem:[#allocation4 + $0x8] sm:$0xff]
    %v313 = vld [vmem:[#allocation4 + $0x10] sm:$0xff]
    %v314 = vld [vmem:[#allocation4 + $0x18] sm:$0xff]
    %v315 = vld [vmem:[#allocation4 + $0x20] sm:$0xff]
    %v316 = vld [vmem:[#allocation4 + $0x28] sm:$0xff]
    %v317 = vld [vmem:[#allocation4 + $0x30] sm:$0xff]
    %v318 = vld [vmem:[#allocation4 + $0x38] sm:$0xff]
    %v319 = vld [vmem:[#allocation4 + $0x40] sm:$0xff]
    %v320 = vld [vmem:[#allocation4 + $0x48] sm:$0xff]
    %v321 = vld [vmem:[#allocation4 + $0x50] sm:$0xff]
    %v322 = vld [vmem:[#allocation4 + $0x58] sm:$0xff]
    %v323 = vld [vmem:[#allocation4 + $0x60] sm:$0xff]
    %v324 = vld [vmem:[#allocation4 + $0x68] sm:$0xff]
    %v325 = vld [vmem:[#allocation4 + $0x70] sm:$0xff]
    %v326 = vld [vmem:[#allocation4 + $0x78] sm:$0xff]
    %v327 = vld [vmem:[#allocation4 + $0x80] sm:$0xff]
    %v328 = vld [vmem:[#allocation4 + $0x88] sm:$0xff]
    %v329 = vld [vmem:[#allocation4 + $0x90] sm:$0xff]
    %v330 = vld [vmem:[#allocation4 + $0x98] sm:$0xff]
    %v331 = vld [vmem:[#allocation4 + $0xa0] sm:$0xff]
    %v332 = vld [vmem:[#allocation4 + $0xa8] sm:$0xff]
    %v333 = vld [vmem:[#allocation4 + $0xb0] sm:$0xff]
    %v334 = vld [vmem:[#allocation4 + $0xb8] sm:$0xff]
    %v335 = vld [vmem:[#allocation4 + $0xc0] sm:$0xff]
    %v336 = vld [vmem:[#allocation4 + $0xc8] sm:$0xff]
    %v337 = vld [vmem:[#allocation4 + $0xd0] sm:$0xff]
    %v338 = vld [vmem:[#allocation4 + $0xd8] sm:$0xff]
    %v339 = vld [vmem:[#allocation4 + $0xe0] sm:$0xff]
    %v340 = vld [vmem:[#allocation4 + $0xe8] sm:$0xff]
    %v341 = vld [vmem:[#allocation4 + $0xf0] sm:$0xff]
    %v342 = vld [vmem:[#allocation4 + $0xf8] sm:$0xff]
    %v343 = vld [vmem:[#allocation4 + $0x100] sm:$0xff]
    %v344 = vld [vmem:[#allocation4 + $0x108] sm:$0xff]
    %v345 = vld [vmem:[#allocation4 + $0x110] sm:$0xff]
    %v346 = vld [vmem:[#allocation4 + $0x118] sm:$0xff]
    %v347 = vld [vmem:[#allocation4 + $0x120] sm:$0xff]
    %v348 = vld [vmem:[#allocation4 + $0x128] sm:$0xff]
    %v349 = vld [vmem:[#allocation4 + $0x130] sm:$0xff]
    %v350 = vld [vmem:[#allocation4 + $0x138] sm:$0xff]
    %v351 = vld [vmem:[#allocation4 + $0x140] sm:$0xff]
    %v352 = vld [vmem:[#allocation4 + $0x148] sm:$0xff]
    %v353 = vld [vmem:[#allocation4 + $0x150] sm:$0xff]
    %v354 = vld [vmem:[#allocation4 + $0x158] sm:$0xff]
    %v355 = vld [vmem:[#allocation4 + $0x160] sm:$0xff]
    %v356 = vld [vmem:[#allocation4 + $0x168] sm:$0xff]
    %v357 = vld [vmem:[#allocation4 + $0x170] sm:$0xff]
    %v358 = vld [vmem:[#allocation4 + $0x178] sm:$0xff]
    %v359 = vld [vmem:[#allocation4 + $0x180] sm:$0xff]
    %v360 = vld [vmem:[#allocation4 + $0x188] sm:$0xff]
    %v361 = vld [vmem:[#allocation4 + $0x190] sm:$0xff]
    %v362 = vld [vmem:[#allocation4 + $0x198] sm:$0xff]
    %v363 = vld [vmem:[#allocation4 + $0x1a0] sm:$0xff]
    %v364 = vld [vmem:[#allocation4 + $0x1a8] sm:$0xff]
    %v365 = vld [vmem:[#allocation4 + $0x1b0] sm:$0xff]
    %v366 = vld [vmem:[#allocation4 + $0x1b8] sm:$0xff]
    %v367 = vld [vmem:[#allocation4 + $0x1c0] sm:$0xff]
    %v368 = vld [vmem:[#allocation4 + $0x1c8] sm:$0xff]
    %v369 = vld [vmem:[#allocation4 + $0x1d0] sm:$0xff]
    %v370 = vld [vmem:[#allocation4 + $0x1d8] sm:$0xff]
    %v371 = vld [vmem:[#allocation4 + $0x1e0] sm:$0xff]
    %v372 = vld [vmem:[#allocation4 + $0x1e8] sm:$0xff]
    %v373 = vld [vmem:[#allocation4 + $0x1f0] sm:$0xff]
    %v374 = vld [vmem:[#allocation4 + $0x1f8] sm:$0xff]
    %v375 = vld [vmem:[%s4] sm:$0x3]
    %v377 = vlaneseq
    %v378 = vshrl.u32 %v377, 7
    %v379 = vsub.s32 0, %v378
    %v380 = vrot.slane %v375, %v379
    %v381 = vlaneseq
    %v382 = vshrl.u32 %v381, 7
    %v383 = vsub.s32 1, %v382
    %v384 = vrot.slane %v375, %v383
    %v451 = vunpack.c.l.b16 %v311
    %v452 = vunpack.c.h.b16 %v311
    %v453 = vunpack.c.l.b16 %v312
    %v454 = vunpack.c.h.b16 %v312
    %v455 = vunpack.c.l.b16 %v313
    %v456 = vunpack.c.h.b16 %v313
    %v457 = vunpack.c.l.b16 %v314
    %v458 = vunpack.c.h.b16 %v314
    %v459 = vunpack.c.l.b16 %v315
    %v460 = vunpack.c.h.b16 %v315
    %v461 = vunpack.c.l.b16 %v316
    %v462 = vunpack.c.h.b16 %v316
    %v463 = vunpack.c.l.b16 %v317
    %v464 = vunpack.c.h.b16 %v317
    %v465 = vunpack.c.l.b16 %v318
    %v466 = vunpack.c.h.b16 %v318
    %v467 = vunpack.c.l.b16 %v319
    %v468 = vunpack.c.h.b16 %v319
    %v469 = vunpack.c.l.b16 %v320
    %v470 = vunpack.c.h.b16 %v320
    %v471 = vunpack.c.l.b16 %v321
    %v472 = vunpack.c.h.b16 %v321
    %v473 = vunpack.c.l.b16 %v322
    %v474 = vunpack.c.h.b16 %v322
    %v475 = vunpack.c.l.b16 %v323
    %v476 = vunpack.c.h.b16 %v323
    %v477 = vunpack.c.l.b16 %v324
    %v478 = vunpack.c.h.b16 %v324
    %v479 = vunpack.c.l.b16 %v325
    %v480 = vunpack.c.h.b16 %v325
    %v481 = vunpack.c.l.b16 %v326
    %v482 = vunpack.c.h.b16 %v326
    %v483 = vunpack.c.l.b16 %v327
    %v484 = vunpack.c.h.b16 %v327
    %v485 = vunpack.c.l.b16 %v328
    %v486 = vunpack.c.h.b16 %v328
    %v487 = vunpack.c.l.b16 %v329
    %v488 = vunpack.c.h.b16 %v329
    %v489 = vunpack.c.l.b16 %v330
    %v490 = vunpack.c.h.b16 %v330
    %v491 = vunpack.c.l.b16 %v331
    %v492 = vunpack.c.h.b16 %v331
    %v493 = vunpack.c.l.b16 %v332
    %v494 = vunpack.c.h.b16 %v332
    %v495 = vunpack.c.l.b16 %v333
    %v496 = vunpack.c.h.b16 %v333
    %v497 = vunpack.c.l.b16 %v334
    %v498 = vunpack.c.h.b16 %v334
    %v499 = vunpack.c.l.b16 %v335
    %v500 = vunpack.c.h.b16 %v335
    %v501 = vunpack.c.l.b16 %v336
    %v502 = vunpack.c.h.b16 %v336
    %v503 = vunpack.c.l.b16 %v337
    %v504 = vunpack.c.h.b16 %v337
    %v505 = vunpack.c.l.b16 %v338
    %v506 = vunpack.c.h.b16 %v338
    %v507 = vunpack.c.l.b16 %v339
    %v508 = vunpack.c.h.b16 %v339
    %v509 = vunpack.c.l.b16 %v340
    %v510 = vunpack.c.h.b16 %v340
    %v511 = vunpack.c.l.b16 %v341
    %v512 = vunpack.c.h.b16 %v341
    %v513 = vunpack.c.l.b16 %v342
    %v514 = vunpack.c.h.b16 %v342
    %v515 = vunpack.c.l.b16 %v343
    %v516 = vunpack.c.h.b16 %v343
    %v517 = vunpack.c.l.b16 %v344
    %v518 = vunpack.c.h.b16 %v344
    %v519 = vunpack.c.l.b16 %v345
    %v520 = vunpack.c.h.b16 %v345
    %v521 = vunpack.c.l.b16 %v346
    %v522 = vunpack.c.h.b16 %v346
    %v523 = vunpack.c.l.b16 %v347
    %v524 = vunpack.c.h.b16 %v347
    %v525 = vunpack.c.l.b16 %v348
    %v526 = vunpack.c.h.b16 %v348
    %v527 = vunpack.c.l.b16 %v349
    %v528 = vunpack.c.h.b16 %v349
    %v529 = vunpack.c.l.b16 %v350
    %v530 = vunpack.c.h.b16 %v350
    %v531 = vunpack.c.l.b16 %v351
    %v532 = vunpack.c.h.b16 %v351
    %v533 = vunpack.c.l.b16 %v352
    %v534 = vunpack.c.h.b16 %v352
    %v535 = vunpack.c.l.b16 %v353
    %v536 = vunpack.c.h.b16 %v353
    %v537 = vunpack.c.l.b16 %v354
    %v538 = vunpack.c.h.b16 %v354
    %v539 = vunpack.c.l.b16 %v355
    %v540 = vunpack.c.h.b16 %v355
    %v541 = vunpack.c.l.b16 %v356
    %v542 = vunpack.c.h.b16 %v356
    %v543 = vunpack.c.l.b16 %v357
    %v544 = vunpack.c.h.b16 %v357
    %v545 = vunpack.c.l.b16 %v358
    %v546 = vunpack.c.h.b16 %v358
    %v547 = vunpack.c.l.b16 %v359
    %v548 = vunpack.c.h.b16 %v359
    %v549 = vunpack.c.l.b16 %v360
    %v550 = vunpack.c.h.b16 %v360
    %v551 = vunpack.c.l.b16 %v361
    %v552 = vunpack.c.h.b16 %v361
    %v553 = vunpack.c.l.b16 %v362
    %v554 = vunpack.c.h.b16 %v362
    %v555 = vunpack.c.l.b16 %v363
    %v556 = vunpack.c.h.b16 %v363
    %v557 = vunpack.c.l.b16 %v364
    %v558 = vunpack.c.h.b16 %v364
    %v559 = vunpack.c.l.b16 %v365
    %v560 = vunpack.c.h.b16 %v365
    %v561 = vunpack.c.l.b16 %v366
    %v562 = vunpack.c.h.b16 %v366
    %v563 = vunpack.c.l.b16 %v367
    %v564 = vunpack.c.h.b16 %v367
    %v565 = vunpack.c.l.b16 %v368
    %v566 = vunpack.c.h.b16 %v368
    %v567 = vunpack.c.l.b16 %v369
    %v568 = vunpack.c.h.b16 %v369
    %v569 = vunpack.c.l.b16 %v370
    %v570 = vunpack.c.h.b16 %v370
    %v571 = vunpack.c.l.b16 %v371
    %v572 = vunpack.c.h.b16 %v371
    %v573 = vunpack.c.l.b16 %v372
    %v574 = vunpack.c.h.b16 %v372
    %v575 = vunpack.c.l.b16 %v373
    %v576 = vunpack.c.h.b16 %v373
    %v577 = vunpack.c.l.b16 %v374
    %v578 = vunpack.c.h.b16 %v374
    %v579 = vpack.c.b16 %v453, %v451
    %v580 = vpack.c.b16 %v454, %v452
    %v581 = vpack.c.b16 %v457, %v455
    %v582 = vpack.c.b16 %v458, %v456
    %v583 = vpack.c.b16 %v461, %v459
    %v584 = vpack.c.b16 %v462, %v460
    %v585 = vpack.c.b16 %v465, %v463
    %v586 = vpack.c.b16 %v466, %v464
    %v587 = vpack.c.b16 %v469, %v467
    %v588 = vpack.c.b16 %v470, %v468
    %v589 = vpack.c.b16 %v473, %v471
    %v590 = vpack.c.b16 %v474, %v472
    %v591 = vpack.c.b16 %v477, %v475
    %v592 = vpack.c.b16 %v478, %v476
    %v593 = vpack.c.b16 %v481, %v479
    %v594 = vpack.c.b16 %v482, %v480
    %v595 = vpack.c.b16 %v485, %v483
    %v596 = vpack.c.b16 %v486, %v484
    %v597 = vpack.c.b16 %v489, %v487
    %v598 = vpack.c.b16 %v490, %v488
    %v599 = vpack.c.b16 %v493, %v491
    %v600 = vpack.c.b16 %v494, %v492
    %v601 = vpack.c.b16 %v497, %v495
    %v602 = vpack.c.b16 %v498, %v496
    %v603 = vpack.c.b16 %v501, %v499
    %v604 = vpack.c.b16 %v502, %v500
    %v605 = vpack.c.b16 %v505, %v503
    %v606 = vpack.c.b16 %v506, %v504
    %v607 = vpack.c.b16 %v509, %v507
    %v608 = vpack.c.b16 %v510, %v508
    %v609 = vpack.c.b16 %v513, %v511
    %v610 = vpack.c.b16 %v514, %v512
    %v611 = vpack.c.b16 %v517, %v515
    %v612 = vpack.c.b16 %v518, %v516
    %v613 = vpack.c.b16 %v521, %v519
    %v614 = vpack.c.b16 %v522, %v520
    %v615 = vpack.c.b16 %v525, %v523
    %v616 = vpack.c.b16 %v526, %v524
    %v617 = vpack.c.b16 %v529, %v527
    %v618 = vpack.c.b16 %v530, %v528
    %v619 = vpack.c.b16 %v533, %v531
    %v620 = vpack.c.b16 %v534, %v532
    %v621 = vpack.c.b16 %v537, %v535
    %v622 = vpack.c.b16 %v538, %v536
    %v623 = vpack.c.b16 %v541, %v539
    %v624 = vpack.c.b16 %v542, %v540
    %v625 = vpack.c.b16 %v545, %v543
    %v626 = vpack.c.b16 %v546, %v544
    %v627 = vpack.c.b16 %v549, %v547
    %v628 = vpack.c.b16 %v550, %v548
    %v629 = vpack.c.b16 %v553, %v551
    %v630 = vpack.c.b16 %v554, %v552
    %v631 = vpack.c.b16 %v557, %v555
    %v632 = vpack.c.b16 %v558, %v556
    %v633 = vpack.c.b16 %v561, %v559
    %v634 = vpack.c.b16 %v562, %v560
    %v635 = vpack.c.b16 %v565, %v563
    %v636 = vpack.c.b16 %v566, %v564
    %v637 = vpack.c.b16 %v569, %v567
    %v638 = vpack.c.b16 %v570, %v568
    %v639 = vpack.c.b16 %v573, %v571
    %v640 = vpack.c.b16 %v574, %v572
    %v641 = vpack.c.b16 %v577, %v575
    %v642 = vpack.c.b16 %v578, %v576
    %707 = vmatprep.subr.bf16.mxu0 %v580
    %708 = vmatpush1.bf16.msra.mxu0 %v579
    %709 = vmatprep.subr.bf16.mxu0 %v582
    %710 = vmatpush1.bf16.msra.mxu0 %v581
    %711 = vmatprep.subr.bf16.mxu0 %v584
    %712 = vmatpush1.bf16.msra.mxu0 %v583
    %713 = vmatprep.subr.bf16.mxu0 %v586
    %714 = vmatpush1.bf16.msra.mxu0 %v585
    %715 = vmatprep.subr.bf16.mxu0 %v588
    %716 = vmatpush1.bf16.msra.mxu0 %v587
    %717 = vmatprep.subr.bf16.mxu0 %v590
    %718 = vmatpush1.bf16.msra.mxu0 %v589
    %719 = vmatprep.subr.bf16.mxu0 %v592
    %720 = vmatpush1.bf16.msra.mxu0 %v591
    %721 = vmatprep.subr.bf16.mxu0 %v594
    %722 = vmatpush1.bf16.msra.mxu0 %v593
    %723 = vmatprep.subr.bf16.mxu0 %v596
    %724 = vmatpush1.bf16.msra.mxu0 %v595
    %725 = vmatprep.subr.bf16.mxu0 %v598
    %726 = vmatpush1.bf16.msra.mxu0 %v597
    %727 = vmatprep.subr.bf16.mxu0 %v600
    %728 = vmatpush1.bf16.msra.mxu0 %v599
    %729 = vmatprep.subr.bf16.mxu0 %v602
    %730 = vmatpush1.bf16.msra.mxu0 %v601
    %731 = vmatprep.subr.bf16.mxu0 %v604
    %732 = vmatpush1.bf16.msra.mxu0 %v603
    %733 = vmatprep.subr.bf16.mxu0 %v606
    %734 = vmatpush1.bf16.msra.mxu0 %v605
    %735 = vmatprep.subr.bf16.mxu0 %v608
    %736 = vmatpush1.bf16.msra.mxu0 %v607
    %737 = vmatprep.subr.bf16.mxu0 %v610
    %738 = vmatpush1.bf16.msra.mxu0 %v609
    %739 = vmatprep.mubr.bf16.mxu0 %v308
    %740 = vmatmul.mubr.bf16.gmra.mrb[0].mxu0 %v307
    %v741 = vpop.f32.mrb[0].mxu0
    %v742 = vadd.f32 %v380, %v741
    %v743 = vpop.f32.mrb[0].mxu0
    %v744 = vadd.f32 %v384, %v743
    %v745 = vpop.f32.mrb[0].mxu0
    %v746 = vadd.f32 %v380, %v745
    %v747 = vpop.f32.mrb[0].mxu0
    %v748 = vadd.f32 %v384, %v747
    %749 = vdwg.mxu0
    %750 = vmatprep.subr.bf16.mxu0 %v612
    %751 = vmatpush1.bf16.msra.mxu0 %v611
    %752 = vmatprep.subr.bf16.mxu0 %v614
    %753 = vmatpush1.bf16.msra.mxu0 %v613
    %754 = vmatprep.subr.bf16.mxu0 %v616
    %755 = vmatpush1.bf16.msra.mxu0 %v615
    %756 = vmatprep.subr.bf16.mxu0 %v618
    %757 = vmatpush1.bf16.msra.mxu0 %v617
    %758 = vmatprep.subr.bf16.mxu0 %v620
    %759 = vmatpush1.bf16.msra.mxu0 %v619
    %760 = vmatprep.subr.bf16.mxu0 %v622
    %761 = vmatpush1.bf16.msra.mxu0 %v621
    %762 = vmatprep.subr.bf16.mxu0 %v624
    %763 = vmatpush1.bf16.msra.mxu0 %v623
    %764 = vmatprep.subr.bf16.mxu0 %v626
    %765 = vmatpush1.bf16.msra.mxu0 %v625
    %766 = vmatprep.subr.bf16.mxu0 %v628
    %767 = vmatpush1.bf16.msra.mxu0 %v627
    %768 = vmatprep.subr.bf16.mxu0 %v630
    %769 = vmatpush1.bf16.msra.mxu0 %v629
    %770 = vmatprep.subr.bf16.mxu0 %v632
    %771 = vmatpush1.bf16.msra.mxu0 %v631
    %772 = vmatprep.subr.bf16.mxu0 %v634
    %773 = vmatpush1.bf16.msra.mxu0 %v633
    %774 = vmatprep.subr.bf16.mxu0 %v636
    %775 = vmatpush1.bf16.msra.mxu0 %v635
    %776 = vmatprep.subr.bf16.mxu0 %v638
    %777 = vmatpush1.bf16.msra.mxu0 %v637
    %778 = vmatprep.subr.bf16.mxu0 %v640
    %779 = vmatpush1.bf16.msra.mxu0 %v639
    %780 = vmatprep.subr.bf16.mxu0 %v642
    %781 = vmatpush1.bf16.msra.mxu0 %v641
    %782 = vmatprep.mubr.bf16.mxu0 %v310
    %783 = vmatmul.mubr.bf16.gmra.mrb[0].mxu0 %v309
    %v784 = vpop.f32.mrb[0].mxu0
    %v785 = vadd.f32 %v742, %v784
    %v786 = vpop.f32.mrb[0].mxu0
    %v787 = vadd.f32 %v744, %v786
    %v788 = vpop.f32.mrb[0].mxu0
    %v789 = vadd.f32 %v746, %v788
    %v790 = vpop.f32.mrb[0].mxu0
    %v791 = vadd.f32 %v748, %v790
    %792 = vdwg.mxu0
    %v793 = vmax.f32 %v785, 0.0
    %v794 = vmax.f32 %v787, 0.0
    %v795 = vmax.f32 %v789, 0.0
    %v796 = vmax.f32 %v791, 0.0
    %v797 = vpack.c.bf16 %v795, %v793
    %v798 = vpack.c.bf16 %v796, %v794
    %v799 = vld [vmem:[#allocation6] sm:$0xf]
    %v800 = vld [vmem:[#allocation6 + $0x4] sm:$0xf]
    %v801 = vld [vmem:[#allocation6 + $0x8] sm:$0xf]
    %v802 = vld [vmem:[#allocation6 + $0xc] sm:$0xf]
    %v803 = vld [vmem:[#allocation6 + $0x10] sm:$0xf]
    %v804 = vld [vmem:[#allocation6 + $0x14] sm:$0xf]
    %v805 = vld [vmem:[#allocation6 + $0x18] sm:$0xf]
    %v806 = vld [vmem:[#allocation6 + $0x1c] sm:$0xf]
    %v807 = vld [vmem:[#allocation6 + $0x20] sm:$0xf]
    %v808 = vld [vmem:[#allocation6 + $0x24] sm:$0xf]
    %v809 = vld [vmem:[#allocation6 + $0x28] sm:$0xf]
    %v810 = vld [vmem:[#allocation6 + $0x2c] sm:$0xf]
    %v811 = vld [vmem:[#allocation6 + $0x30] sm:$0xf]
    %v812 = vld [vmem:[#allocation6 + $0x34] sm:$0xf]
    %v813 = vld [vmem:[#allocation6 + $0x38] sm:$0xf]
    %v814 = vld [vmem:[#allocation6 + $0x3c] sm:$0xf]
    %v815 = vld [vmem:[#allocation6 + $0x40] sm:$0xf]
    %v816 = vld [vmem:[#allocation6 + $0x44] sm:$0xf]
    %v817 = vld [vmem:[#allocation6 + $0x48] sm:$0xf]
    %v818 = vld [vmem:[#allocation6 + $0x4c] sm:$0xf]
    %v819 = vld [vmem:[#allocation6 + $0x50] sm:$0xf]
    %v820 = vld [vmem:[#allocation6 + $0x54] sm:$0xf]
    %v821 = vld [vmem:[#allocation6 + $0x58] sm:$0xf]
    %v822 = vld [vmem:[#allocation6 + $0x5c] sm:$0xf]
    %v823 = vld [vmem:[#allocation6 + $0x60] sm:$0xf]
    %v824 = vld [vmem:[#allocation6 + $0x64] sm:$0xf]
    %v825 = vld [vmem:[#allocation6 + $0x68] sm:$0xf]
    %v826 = vld [vmem:[#allocation6 + $0x6c] sm:$0xf]
    %v827 = vld [vmem:[#allocation6 + $0x70] sm:$0xf]
    %v828 = vld [vmem:[#allocation6 + $0x74] sm:$0xf]
    %v829 = vld [vmem:[#allocation6 + $0x78] sm:$0xf]
    %v830 = vld [vmem:[#allocation6 + $0x7c] sm:$0xf]
    %v831 = vld [vmem:[%s6] sm:$0x1]
    %v833 = vlaneseq
    %v834 = vshrl.u32 %v833, 7
    %v835 = vsub.s32 0, %v834
    %v836 = vrot.slane %v831, %v835
    %v870 = vunpack.c.l.b16 %v799
    %v871 = vunpack.c.l.b16 %v800
    %v872 = vunpack.c.l.b16 %v801
    %v873 = vunpack.c.l.b16 %v802
    %v874 = vunpack.c.l.b16 %v803
    %v875 = vunpack.c.l.b16 %v804
    %v876 = vunpack.c.l.b16 %v805
    %v877 = vunpack.c.l.b16 %v806
    %v878 = vunpack.c.l.b16 %v807
    %v879 = vunpack.c.l.b16 %v808
    %v880 = vunpack.c.l.b16 %v809
    %v881 = vunpack.c.l.b16 %v810
    %v882 = vunpack.c.l.b16 %v811
    %v883 = vunpack.c.l.b16 %v812
    %v884 = vunpack.c.l.b16 %v813
    %v885 = vunpack.c.l.b16 %v814
    %v886 = vunpack.c.l.b16 %v815
    %v887 = vunpack.c.l.b16 %v816
    %v888 = vunpack.c.l.b16 %v817
    %v889 = vunpack.c.l.b16 %v818
    %v890 = vunpack.c.l.b16 %v819
    %v891 = vunpack.c.l.b16 %v820
    %v892 = vunpack.c.l.b16 %v821
    %v893 = vunpack.c.l.b16 %v822
    %v894 = vunpack.c.l.b16 %v823
    %v895 = vunpack.c.l.b16 %v824
    %v896 = vunpack.c.l.b16 %v825
    %v897 = vunpack.c.l.b16 %v826
    %v898 = vunpack.c.l.b16 %v827
    %v899 = vunpack.c.l.b16 %v828
    %v900 = vunpack.c.l.b16 %v829
    %v901 = vunpack.c.l.b16 %v830
    %v902 = vpack.c.b16 %v871, %v870
    %v903 = vpack.c.b16 %v873, %v872
    %v904 = vpack.c.b16 %v875, %v874
    %v905 = vpack.c.b16 %v877, %v876
    %v906 = vpack.c.b16 %v879, %v878
    %v907 = vpack.c.b16 %v881, %v880
    %v908 = vpack.c.b16 %v883, %v882
    %v909 = vpack.c.b16 %v885, %v884
    %v910 = vpack.c.b16 %v887, %v886
    %v911 = vpack.c.b16 %v889, %v888
    %v912 = vpack.c.b16 %v891, %v890
    %v913 = vpack.c.b16 %v893, %v892
    %v914 = vpack.c.b16 %v895, %v894
    %v915 = vpack.c.b16 %v897, %v896
    %v916 = vpack.c.b16 %v899, %v898
    %v917 = vpack.c.b16 %v901, %v900
    %934 = vmatprep.subr.bf16.mxu0 0
    %935 = vmatpush1.bf16.msra.mxu0 %v902
    %936 = vmatprep.subr.bf16.mxu0 0
    %937 = vmatpush1.bf16.msra.mxu0 %v903
    %938 = vmatprep.subr.bf16.mxu0 0
    %939 = vmatpush1.bf16.msra.mxu0 %v904
    %940 = vmatprep.subr.bf16.mxu0 0
    %941 = vmatpush1.bf16.msra.mxu0 %v905
    %942 = vmatprep.subr.bf16.mxu0 0
    %943 = vmatpush1.bf16.msra.mxu0 %v906
    %944 = vmatprep.subr.bf16.mxu0 0
    %945 = vmatpush1.bf16.msra.mxu0 %v907
    %946 = vmatprep.subr.bf16.mxu0 0
    %947 = vmatpush1.bf16.msra.mxu0 %v908
    %948 = vmatprep.subr.bf16.mxu0 0
    %949 = vmatpush1.bf16.msra.mxu0 %v909
    %950 = vmatprep.subr.bf16.mxu0 0
    %951 = vmatpush1.bf16.msra.mxu0 %v910
    %952 = vmatprep.subr.bf16.mxu0 0
    %953 = vmatpush1.bf16.msra.mxu0 %v911
    %954 = vmatprep.subr.bf16.mxu0 0
    %955 = vmatpush1.bf16.msra.mxu0 %v912
    %956 = vmatprep.subr.bf16.mxu0 0
    %957 = vmatpush1.bf16.msra.mxu0 %v913
    %958 = vmatprep.subr.bf16.mxu0 0
    %959 = vmatpush1.bf16.msra.mxu0 %v914
    %960 = vmatprep.subr.bf16.mxu0 0
    %961 = vmatpush1.bf16.msra.mxu0 %v915
    %962 = vmatprep.subr.bf16.mxu0 0
    %963 = vmatpush1.bf16.msra.mxu0 %v916
    %964 = vmatprep.subr.bf16.mxu0 0
    %965 = vmatpush1.bf16.msra.mxu0 %v917
    %966 = vmatprep.mubr.bf16.mxu0 %v798
    %967 = vmatmul.mubr.bf16.gmra.mrb[0].mxu0 %v797
    %v968 = vpop.f32.mrb[0].mxu0
    %v969 = vadd.f32 %v836, %v968
    %v970 = vpop.f32.mrb[0].mxu0
    %v971 = vpop.f32.mrb[0].mxu0
    %v972 = vadd.f32 %v836, %v971
    %v973 = vpop.f32.mrb[0].mxu0
    %974 = vdwg.mxu0
    %v975 = vmax.f32 %v969, 0.0
    %v976 = vmax.f32 %v972, 0.0
    %v977 = vpack.c.bf16 %v976, %v975
    %v978 = vld [vmem:[#allocation7] sm:$0xf]
    %v979 = vld [vmem:[#allocation7 + $0x4] sm:$0xf]
    %v980 = vld [vmem:[#allocation7 + $0x8] sm:$0xf]
    %v981 = vld [vmem:[#allocation7 + $0xc] sm:$0xf]
    %v982 = vld [vmem:[#allocation7 + $0x10] sm:$0xf]
    %v983 = vld [vmem:[#allocation7 + $0x14] sm:$0xf]
    %v984 = vld [vmem:[#allocation7 + $0x18] sm:$0xf]
    %v985 = vld [vmem:[#allocation7 + $0x1c] sm:$0xf]
    %v986 = vld [vmem:[#allocation7 + $0x20] sm:$0xf]
    %v987 = vld [vmem:[#allocation7 + $0x24] sm:$0xf]
    %v988 = vld [vmem:[#allocation7 + $0x28] sm:$0xf]
    %v989 = vld [vmem:[#allocation7 + $0x2c] sm:$0xf]
    %v990 = vld [vmem:[#allocation7 + $0x30] sm:$0xf]
    %v991 = vld [vmem:[#allocation7 + $0x34] sm:$0xf]
    %v992 = vld [vmem:[#allocation7 + $0x38] sm:$0xf]
    %v993 = vld [vmem:[#allocation7 + $0x3c] sm:$0xf]
    %v994 = vld [vmem:[%s8] sm:$0x1]
    %v996 = vlaneseq
    %v997 = vshrl.u32 %v996, 7
    %v998 = vsub.s32 0, %v997
    %v999 = vrot.slane %v994, %v998
    %v1017 = vunpack.c.l.b16 %v978
    %v1018 = vunpack.c.l.b16 %v979
    %v1019 = vunpack.c.l.b16 %v980
    %v1020 = vunpack.c.l.b16 %v981
    %v1021 = vunpack.c.l.b16 %v982
    %v1022 = vunpack.c.l.b16 %v983
    %v1023 = vunpack.c.l.b16 %v984
    %v1024 = vunpack.c.l.b16 %v985
    %v1025 = vunpack.c.l.b16 %v986
    %v1026 = vunpack.c.l.b16 %v987
    %v1027 = vunpack.c.l.b16 %v988
    %v1028 = vunpack.c.l.b16 %v989
    %v1029 = vunpack.c.l.b16 %v990
    %v1030 = vunpack.c.l.b16 %v991
    %v1031 = vunpack.c.l.b16 %v992
    %v1032 = vunpack.c.l.b16 %v993
    %v1033 = vpack.c.b16 %v1018, %v1017
    %v1034 = vpack.c.b16 %v1020, %v1019
    %v1035 = vpack.c.b16 %v1022, %v1021
    %v1036 = vpack.c.b16 %v1024, %v1023
    %v1037 = vpack.c.b16 %v1026, %v1025
    %v1038 = vpack.c.b16 %v1028, %v1027
    %v1039 = vpack.c.b16 %v1030, %v1029
    %v1040 = vpack.c.b16 %v1032, %v1031
    %1049 = vmatprep.subr.bf16.mxu0 0
    %1050 = vmatpush1.bf16.msra.mxu0 %v1033
    %1051 = vmatprep.subr.bf16.mxu0 0
    %1052 = vmatpush1.bf16.msra.mxu0 %v1034
    %1053 = vmatprep.subr.bf16.mxu0 0
    %1054 = vmatpush1.bf16.msra.mxu0 %v1035
    %1055 = vmatprep.subr.bf16.mxu0 0
    %1056 = vmatpush1.bf16.msra.mxu0 %v1036
    %1057 = vmatprep.subr.bf16.mxu0 0
    %1058 = vmatpush1.bf16.msra.mxu0 %v1037
    %1059 = vmatprep.subr.bf16.mxu0 0
    %1060 = vmatpush1.bf16.msra.mxu0 %v1038
    %1061 = vmatprep.subr.bf16.mxu0 0
    %1062 = vmatpush1.bf16.msra.mxu0 %v1039
    %1063 = vmatprep.subr.bf16.mxu0 0
    %1064 = vmatpush1.bf16.msra.mxu0 %v1040
    %1065 = vmatprep.subr.bf16.mxu0 0
    %1066 = vmatpush1.bf16.msra.mxu0 0
    %1067 = vmatprep.subr.bf16.mxu0 0
    %1068 = vmatpush1.bf16.msra.mxu0 0
    %1069 = vmatprep.subr.bf16.mxu0 0
    %1070 = vmatpush1.bf16.msra.mxu0 0
    %1071 = vmatprep.subr.bf16.mxu0 0
    %1072 = vmatpush1.bf16.msra.mxu0 0
    %1073 = vmatprep.subr.bf16.mxu0 0
    %1074 = vmatpush1.bf16.msra.mxu0 0
    %1075 = vmatprep.subr.bf16.mxu0 0
    %1076 = vmatpush1.bf16.msra.mxu0 0
    %1077 = vmatprep.subr.bf16.mxu0 0
    %1078 = vmatpush1.bf16.msra.mxu0 0
    %1079 = vmatprep.subr.bf16.mxu0 0
    %1080 = vmatpush1.bf16.msra.mxu0 0
    %1081 = vmatprep.mubr.bf16.mxu0 0
    %1082 = vmatmul.mubr.bf16.gmra.mrb[0].mxu0 %v977
    %v1083 = vpop.f32.mrb[0].mxu0
    %v1084 = vadd.f32 %v999, %v1083
    %v1085 = vpop.f32.mrb[0].mxu0
    %v1086 = vpop.f32.mrb[0].mxu0
    %v1087 = vadd.f32 %v999, %v1086
    %v1088 = vpop.f32.mrb[0].mxu0
    %1089 = vdwg.mxu0
    %1090 = vmax.xlane.f32.xlu0 %v1084
    %v1091 = vpop.xlane.xlu0 %1090
    %1092 = vmax.xlane.f32.xlu0 %v1087
    %v1093 = vpop.xlane.xlu0 %1092
    %v1094 = vsub.f32 %v1084, %v1091
    %v1095 = vsub.f32 %v1087, %v1093
    %v1096 = vmul.f32 %v1094, 1.442695
    %v1097 = vpow.pop %v1096
    %v1098 = vmul.f32 %v1095, 1.442695
    %v1099 = vpow.pop %v1098
    %1100 = vadd.xlane.f32.xlu0 %v1097
    %v1101 = vpop.xlane.xlu0 %1100
    %1102 = vadd.xlane.f32.xlu0 %v1099
    %v1103 = vpop.xlane.xlu0 %1102
    %v1104 = vrcp.pop %v1101
    %v1105 = vrcp.pop %v1103
    %v1106 = vmul.f32 %v1097, %v1104
    %v1107 = vmul.f32 %v1099, %v1105
    %v1108 = vpack.c.bf16 %v1107, %v1106
    %v1110 = vunpack.c.l.b16 %v1108
    %v1111 = vunpack.c.h.b16 %v1108
    %v1112 = vpack.c.b16 %v1110, %v1110
    %v1113 = vpack.c.b16 %v1111, %v1111
    %1116 = vst [vmem:[%s9] sm:$0xf] %v1112
    %1117 = vst [vmem:[%s9 + $0x4] sm:$0xf] %v1113
    // Predicated region
    $region54: #{fcnet_forward.1} parent=1 // pred_check
      _
    $region55: #{fcnet_forward.1} parent=1 // pred_check_branch
      %1119 = sbr.rel (0) target = $region57
    $region56: #{fcnet_forward.1} parent=1 // pred_region
      _
    $region57: #{fcnet_forward.1} parent=1 // pred_fallthru
      _
    // Predicated region
    $region58: #{fcnet_forward.1} parent=1 // pred_check
      _
    $region59: #{fcnet_forward.1} parent=1 // pred_check_branch
      %1121 = sbr.rel (0) target = $region61
    $region60: #{fcnet_forward.1} parent=1 // pred_region
      _
    $region61: #{fcnet_forward.1} parent=1 // pred_fallthru
      _
    %1122 = vsyncpa [#allocation3], 1
    %1123 = vsyncpa [#allocation5], 1
    %1124 = vsyncpa [#allocation8], 1

</llo_original>
